<compile_context>
chip_gen: v5e
topology: v5e:2x2
jax: 0.10.0
libtpu: 0.0.40
codegen_flags: <defaults>
</compile_context>

<pallas_src>
import jax
import jax.numpy as jnp
from jax.experimental import pallas as pl
from jax.experimental.pallas import tpu as pltpu


def _round_up(x, m):
    return ((x + m - 1) // m) * m


def _im2col_gemm_kernel(p_ref, w_ref, b_ref, o_ref):
    """One row-tile of the im2col GEMM.

    p_ref : (TM, K)     bf16 patch rows (K = kh*kw*Cin, unpadded)
    w_ref : (K, Cout)   bf16 folded conv weights (resident across grid)
    b_ref : (1, Cout)   f32  concatenated bias (resident)
    o_ref : (TM, Cout)  f32  output rows (unpadded Cout)
    """
    acc = jnp.dot(p_ref[...], w_ref[...], preferred_element_type=jnp.float32)
    o_ref[...] = (acc + b_ref[...]).astype(o_ref.dtype)


def adafm_conv_forward(x_nchw, W_ext, b_ext, conv_weight, conv_bias,
                       padding=1, tile_m=1024):
    """AdaFM_Conv.forward(input, W, b, task_id=-1) — parent-task branch."""
    # Parameter glue (matches torch.cat along output-channel dim 0).
    W_f = jnp.concatenate([W_ext, conv_weight], axis=0)    # (Cout, Cin, kh, kw)
    b_f = jnp.concatenate([b_ext, conv_bias], axis=0)      # (Cout,)

    N, Cin, H, Wd = x_nchw.shape
    Cout, _, kh, kw = W_f.shape

    # Output spatial dims derived explicitly (stride fixed to 1 in the module).
    Ho = H + 2 * padding - kh + 1
    Wo = Wd + 2 * padding - kw + 1

    # NCHW -> NHWC (channels on the lane axis), cast to bf16 BEFORE im2col so
    # the whole materialization pass runs at half the HBM traffic, then pad
    # spatially.
    x_nhwc = jnp.transpose(x_nchw, (0, 2, 3, 1)).astype(jnp.bfloat16)
    x_pad = jnp.pad(
        x_nhwc, ((0, 0), (padding, padding), (padding, padding), (0, 0)))

    # im2col: stack the kh*kw shifted views along the channel axis.
    # K index layout = (dh*kw + dw)*Cin + c, matching the weight fold below.
    taps = []
    for dh in range(kh):
        for dw in range(kw):
            taps.append(x_pad[:, dh:dh + Ho, dw:dw + Wo, :])
    K = kh * kw * Cin
    M = N * Ho * Wo
    patches = jnp.concatenate(taps, axis=-1).reshape(M, K)   # bf16, unpadded K

    # Tile the GEMM M dimension only.  Clamp the tile for tiny inputs so we
    # don't pad M far beyond the real row count.
    tile_m_eff = min(tile_m, _round_up(M, 8))
    M_pad = _round_up(M, tile_m_eff)
    if M_pad != M:
        patches = jnp.pad(patches, ((0, M_pad - M), (0, 0)))

    # (Cout, Cin, kh, kw) -> (kh, kw, Cin, Cout) -> (K, Cout); no padding.
    w_mat = jnp.transpose(W_f, (2, 3, 1, 0)).reshape(K, Cout).astype(jnp.bfloat16)
    b_mat = b_f.reshape(1, Cout).astype(jnp.float32)

    out_dtype = x_nchw.dtype
    out_bytes = jnp.dtype(out_dtype).itemsize
    cost = pl.CostEstimate(
        flops=2 * M_pad * K * Cout,
        transcendentals=0,
        bytes_accessed=(M_pad * K * 2            # patch reads (bf16)
                        + K * Cout * 2           # weight reads (bf16)
                        + Cout * 4               # bias
                        + M_pad * Cout * out_bytes),  # output writes
    )

    grid = (M_pad // tile_m_eff,)
    out = pl.pallas_call(
        _im2col_gemm_kernel,
        out_shape=jax.ShapeDtypeStruct((M_pad, Cout), out_dtype),
        grid=grid,
        in_specs=[
            pl.BlockSpec((tile_m_eff, K), lambda i: (i, 0)),
            pl.BlockSpec((K, Cout), lambda i: (0, 0)),
            pl.BlockSpec((1, Cout), lambda i: (0, 0)),
        ],
        out_specs=pl.BlockSpec((tile_m_eff, Cout), lambda i: (i, 0)),
        compiler_params=pltpu.CompilerParams(
            dimension_semantics=("parallel",),
            vmem_limit_bytes=32 * 1024 * 1024,
        ),
        cost_estimate=cost,
    )(patches, w_mat, b_mat)

    # Strip M padding, restore (N, Ho, Wo, Cout) then NCHW (PyTorch layout).
    out = out[:M, :].reshape(N, Ho, Wo, Cout)
    return jnp.transpose(out, (0, 3, 1, 2))


if __name__ == "__main__":
    # Small shapes consistent with the module:
    #   in_channel=4, conv out_channel=4, external W contributes 4 more output
    #   channels -> total Cout=8; kernel 3x3, padding=1, stride=1.
    N, Cin, H, W = 2, 4, 16, 16
    O_ext, O_self = 4, 4
    kh, kw = 3, 3

    key = jax.random.PRNGKey(0)
    k_x, k_we, k_be, k_wc, k_bc = jax.random.split(key, 5)

    x = jax.random.normal(k_x, (N, Cin, H, W), dtype=jnp.float32)
    # "W"/"b" passed into forward (previous-task weights).
    W_ext = jax.random.normal(k_we, (O_ext, Cin, kh, kw), dtype=jnp.float32) * 0.1
    b_ext = jax.random.normal(k_be, (O_ext,), dtype=jnp.float32) * 0.1
    # self.conv_t.weight / self.conv_t.bias (deterministic synthetic init).
    conv_w = jax.random.normal(k_wc, (O_self, Cin, kh, kw), dtype=jnp.float32) * 0.1
    conv_b = jax.random.normal(k_bc, (O_self,), dtype=jnp.float32) * 0.1

    out = adafm_conv_forward(x, W_ext, b_ext, conv_w, conv_b, padding=1)
    out = jax.block_until_ready(out)

    # Reference: XLA conv with the SAME bf16 operands and f32 accumulation
    # (kernel runs bf16-in / f32-accumulate; documented ~1e-3 tolerance vs.
    # pure-f32 torch conv2d).
    W_f = jnp.concatenate([W_ext, conv_w], axis=0)
    b_f = jnp.concatenate([b_ext, conv_b], axis=0)
    ref = jax.lax.conv_general_dilated(
        x.astype(jnp.bfloat16), W_f.astype(jnp.bfloat16),
        window_strides=(1, 1), padding=((1, 1), (1, 1)),
        dimension_numbers=("NCHW", "OIHW", "NCHW"),
        preferred_element_type=jnp.float32,
    ) + b_f[None, :, None, None]

    assert out.shape == (N, O_ext + O_self, H, W)
    assert jnp.allclose(out, ref, atol=1e-3, rtol=1e-3)

    print("KERNEL_OK")
</pallas_src>

<mosaic_0001>
module attributes {stable_mosaic.version = 11 : i64} {
  func.func @_im2col_gemm_kernel(%arg0: i32, %arg1: memref<512x36xbf16, #tpu.memory_space<vmem>>, %arg2: memref<36x8xbf16, #tpu.memory_space<vmem>>, %arg3: memref<1x8xf32, #tpu.memory_space<vmem>>, %arg4: memref<512x8xf32, #tpu.memory_space<vmem>>) attributes {dimension_semantics = [#tpu.dimension_semantics<parallel>], iteration_bounds = array<i64: 1>, scalar_prefetch = 0 : i64, scratch_operands = 0 : i64, tpu.core_type = #tpu.core_type<tc>, window_params = [{transform_indices = @transform_0, window_bounds = array<i64: 512, 36>}, {pipeline_mode = #tpu.pipeline_mode<synchronous>, transform_indices = @transform_1, window_bounds = array<i64: 36, 8>}, {pipeline_mode = #tpu.pipeline_mode<synchronous>, transform_indices = @transform_2, window_bounds = array<i64: 1, 8>}, {transform_indices = @transform_3, window_bounds = array<i64: 512, 8>}]} {
    %c0 = arith.constant 0 : index
    %c0_0 = arith.constant 0 : index
    %0 = vector.load %arg1[%c0, %c0_0] : memref<512x36xbf16, #tpu.memory_space<vmem>>, vector<512x36xbf16>
    %c0_1 = arith.constant 0 : index
    %c0_2 = arith.constant 0 : index
    %1 = vector.load %arg2[%c0_1, %c0_2] : memref<36x8xbf16, #tpu.memory_space<vmem>>, vector<36x8xbf16>
    %cst = arith.constant dense<0.000000e+00> : vector<512x8xf32>
    %2 = tpu.matmul %0, %1, %cst {dimension_numbers = #tpu.dot_dimension_numbers<[1], [0], [0], [1], [0, 0, 1, 1], [], []>} : vector<512x36xbf16>, vector<36x8xbf16>, vector<512x8xf32> -> vector<512x8xf32>
    %c0_3 = arith.constant 0 : index
    %c0_4 = arith.constant 0 : index
    %3 = vector.load %arg3[%c0_3, %c0_4] : memref<1x8xf32, #tpu.memory_space<vmem>>, vector<1x8xf32>
    %4 = vector.broadcast %3 : vector<1x8xf32> to vector<512x8xf32>
    %5 = arith.addf %2, %4 : vector<512x8xf32>
    %c0_5 = arith.constant 0 : index
    %c0_6 = arith.constant 0 : index
    %6 = vector.load %arg4[%c0_5, %c0_6] : memref<512x8xf32, #tpu.memory_space<vmem>>, vector<512x8xf32>
    tpu.vector_store %arg4[%c0_5, %c0_6], %5 {strides = array<i32>} : memref<512x8xf32, #tpu.memory_space<vmem>>, vector<512x8xf32>,
    return
  }
  func.func @transform_0(%arg0: i32) -> (i32, i32) {
    %c0_i32 = arith.constant 0 : i32
    %c0_i32_0 = arith.constant 0 : i32
    return %arg0, %c0_i32 : i32, i32
  }
  func.func @transform_1(%arg0: i32) -> (i32, i32) {
    %c0_i32 = arith.constant 0 : i32
    %c0_i32_0 = arith.constant 0 : i32
    %c0_i32_1 = arith.constant 0 : i32
    return %c0_i32, %c0_i32_0 : i32, i32
  }
  func.func @transform_2(%arg0: i32) -> (i32, i32) {
    %c0_i32 = arith.constant 0 : i32
    %c0_i32_0 = arith.constant 0 : i32
    %c0_i32_1 = arith.constant 0 : i32
    return %c0_i32, %c0_i32_0 : i32, i32
  }
  func.func @transform_3(%arg0: i32) -> (i32, i32) {
    %c0_i32 = arith.constant 0 : i32
    %c0_i32_0 = arith.constant 0 : i32
    return %arg0, %c0_i32 : i32, i32
  }
}

</mosaic_0001>

<llo_original>
// kernel: tpu_custom_call.1
$region0: #{tpu_custom_call.1}
  #allocation0 [shape = 'u32[]', space=smem, size = 0x4, offset = 0x4, fixed_abs, tag = 'smem constant byte address 0x4 - core index']
  #allocation1 [shape = 'u32[72,128]{1,0:T(1,128)}', space=vmem, size = 0x9000, scoped, tag = 'internal scratch']
  %s0 = inlined_call_operand.vmem [shape: bf16[512,36], index: 0, kind: input, shape index: {}]
  %s1 = inlined_call_operand.vmem [shape: bf16[36,8], index: 1, kind: input, shape index: {}]
  %s2 = inlined_call_operand.vmem [shape: f32[1,8], index: 2, kind: input, shape index: {}]
  %s3 = inlined_call_operand.vmem [shape: f32[512,8], index: 3, kind: output, shape index: {}]
  %s4 = sld [smem:[#allocation0]]
  $region22: #{tpu_custom_call.1} parent=0
    _
  %s6 = ssub.s32 1, %s4
  %s7 = scalar_select 0, %s6, %s4
  // Predicated region
  $region2: #{tpu_custom_call.1} parent=0 // pred_check
    _
  $region3: #{tpu_custom_call.1} parent=0 // pred_check_branch
    %9 = sbr.rel (0) target = $region5
  $region4: #{tpu_custom_call.1} parent=0 // pred_region
    _
  $region5: #{tpu_custom_call.1} parent=0 // pred_fallthru
    _
  // Predicated region
  $region6: #{tpu_custom_call.1} parent=0 // pred_check
    _
  $region7: #{tpu_custom_call.1} parent=0 // pred_check_branch
    %11 = sbr.rel (0) target = $region9
  $region8: #{tpu_custom_call.1} parent=0 // pred_region
    _
  $region9: #{tpu_custom_call.1} parent=0 // pred_fallthru
    _
  // Predicated region
  $region10: #{tpu_custom_call.1} parent=0 // pred_check
    _
  $region11: #{tpu_custom_call.1} parent=0 // pred_check_branch
    %13 = sbr.rel (0) target = $region13
  $region12: #{tpu_custom_call.1} parent=0 // pred_region
    _
  $region13: #{tpu_custom_call.1} parent=0 // pred_fallthru
    _
  %v15 = vld [vmem:[%s0] sm:$0xf]
  %v16 = vld [vmem:[%s0 + $0x4] sm:$0xf]
  %v17 = vld [vmem:[%s0 + $0x8] sm:$0xf]
  %v18 = vld [vmem:[%s0 + $0xc] sm:$0xf]
  %v19 = vld [vmem:[%s0 + $0x10] sm:$0xf]
  %v20 = vld [vmem:[%s0 + $0x14] sm:$0xf]
  %v21 = vld [vmem:[%s0 + $0x18] sm:$0xf]
  %v22 = vld [vmem:[%s0 + $0x1c] sm:$0xf]
  %v23 = vld [vmem:[%s0 + $0x20] sm:$0xf]
  %v24 = vld [vmem:[%s0 + $0x24] sm:$0xf]
  %v25 = vld [vmem:[%s0 + $0x28] sm:$0xf]
  %v26 = vld [vmem:[%s0 + $0x2c] sm:$0xf]
  %v27 = vld [vmem:[%s0 + $0x30] sm:$0xf]
  %v28 = vld [vmem:[%s0 + $0x34] sm:$0xf]
  %v29 = vld [vmem:[%s0 + $0x38] sm:$0xf]
  %v30 = vld [vmem:[%s0 + $0x3c] sm:$0xf]
  %v31 = vld [vmem:[%s0 + $0x40] sm:$0xf]
  %v32 = vld [vmem:[%s0 + $0x44] sm:$0xf]
  %v33 = vld [vmem:[%s0 + $0x48] sm:$0xf]
  %v34 = vld [vmem:[%s0 + $0x4c] sm:$0xf]
  %v35 = vld [vmem:[%s0 + $0x50] sm:$0xf]
  %v36 = vld [vmem:[%s0 + $0x54] sm:$0xf]
  %v37 = vld [vmem:[%s0 + $0x58] sm:$0xf]
  %v38 = vld [vmem:[%s0 + $0x5c] sm:$0xf]
  %v39 = vld [vmem:[%s0 + $0x60] sm:$0xf]
  %v40 = vld [vmem:[%s0 + $0x64] sm:$0xf]
  %v41 = vld [vmem:[%s0 + $0x68] sm:$0xf]
  %v42 = vld [vmem:[%s0 + $0x6c] sm:$0xf]
  %v43 = vld [vmem:[%s0 + $0x70] sm:$0xf]
  %v44 = vld [vmem:[%s0 + $0x74] sm:$0xf]
  %v45 = vld [vmem:[%s0 + $0x78] sm:$0xf]
  %v46 = vld [vmem:[%s0 + $0x7c] sm:$0xf]
  %v47 = vld [vmem:[%s0 + $0x80] sm:$0xf]
  %v48 = vld [vmem:[%s0 + $0x84] sm:$0xf]
  %v49 = vld [vmem:[%s0 + $0x88] sm:$0xf]
  %v50 = vld [vmem:[%s0 + $0x8c] sm:$0xf]
  %v51 = vld [vmem:[%s0 + $0x90] sm:$0xf]
  %v52 = vld [vmem:[%s0 + $0x94] sm:$0xf]
  %v53 = vld [vmem:[%s0 + $0x98] sm:$0xf]
  %v54 = vld [vmem:[%s0 + $0x9c] sm:$0xf]
  %v55 = vld [vmem:[%s0 + $0xa0] sm:$0xf]
  %v56 = vld [vmem:[%s0 + $0xa4] sm:$0xf]
  %v57 = vld [vmem:[%s0 + $0xa8] sm:$0xf]
  %v58 = vld [vmem:[%s0 + $0xac] sm:$0xf]
  %v59 = vld [vmem:[%s0 + $0xb0] sm:$0xf]
  %v60 = vld [vmem:[%s0 + $0xb4] sm:$0xf]
  %v61 = vld [vmem:[%s0 + $0xb8] sm:$0xf]
  %v62 = vld [vmem:[%s0 + $0xbc] sm:$0xf]
  %v63 = vld [vmem:[%s0 + $0xc0] sm:$0xf]
  %v64 = vld [vmem:[%s0 + $0xc4] sm:$0xf]
  %v65 = vld [vmem:[%s0 + $0xc8] sm:$0xf]
  %v66 = vld [vmem:[%s0 + $0xcc] sm:$0xf]
  %v67 = vld [vmem:[%s0 + $0xd0] sm:$0xf]
  %v68 = vld [vmem:[%s0 + $0xd4] sm:$0xf]
  %v69 = vld [vmem:[%s0 + $0xd8] sm:$0xf]
  %v70 = vld [vmem:[%s0 + $0xdc] sm:$0xf]
  %v71 = vld [vmem:[%s0 + $0xe0] sm:$0xf]
  %v72 = vld [vmem:[%s0 + $0xe4] sm:$0xf]
  %v73 = vld [vmem:[%s0 + $0xe8] sm:$0xf]
  %v74 = vld [vmem:[%s0 + $0xec] sm:$0xf]
  %v75 = vld [vmem:[%s0 + $0xf0] sm:$0xf]
  %v76 = vld [vmem:[%s0 + $0xf4] sm:$0xf]
  %v77 = vld [vmem:[%s0 + $0xf8] sm:$0xf]
  %v78 = vld [vmem:[%s0 + $0xfc] sm:$0xf]
  %v79 = vld [vmem:[%s1] sm:$0xf]
  %v80 = vld [vmem:[%s1 + $0x4] sm:$0xf]
  %v81 = vld [vmem:[%s1 + $0x8] sm:$0xf]
  %v82 = vld [vmem:[%s1 + $0xc] sm:$0xf]
  %v83 = vld [vmem:[%s1 + $0x10] sm:$0x3]
  %v84 = vld [vmem:[%s2] sm:$0x1]
  %v86 = vperm.slane %v84, 0
  %v152 = vunpack.c.l.b16 %v15
  %v153 = vunpack.c.l.b16 %v16
  %v154 = vunpack.c.l.b16 %v17
  %v155 = vunpack.c.l.b16 %v18
  %v156 = vunpack.c.l.b16 %v19
  %v157 = vunpack.c.l.b16 %v20
  %v158 = vunpack.c.l.b16 %v21
  %v159 = vunpack.c.l.b16 %v22
  %v160 = vunpack.c.l.b16 %v23
  %v161 = vunpack.c.l.b16 %v24
  %v162 = vunpack.c.l.b16 %v25
  %v163 = vunpack.c.l.b16 %v26
  %v164 = vunpack.c.l.b16 %v27
  %v165 = vunpack.c.l.b16 %v28
  %v166 = vunpack.c.l.b16 %v29
  %v167 = vunpack.c.l.b16 %v30
  %v168 = vunpack.c.l.b16 %v31
  %v169 = vunpack.c.l.b16 %v32
  %v170 = vunpack.c.l.b16 %v33
  %v171 = vunpack.c.l.b16 %v34
  %v172 = vunpack.c.l.b16 %v35
  %v173 = vunpack.c.l.b16 %v36
  %v174 = vunpack.c.l.b16 %v37
  %v175 = vunpack.c.l.b16 %v38
  %v176 = vunpack.c.l.b16 %v39
  %v177 = vunpack.c.l.b16 %v40
  %v178 = vunpack.c.l.b16 %v41
  %v179 = vunpack.c.l.b16 %v42
  %v180 = vunpack.c.l.b16 %v43
  %v181 = vunpack.c.l.b16 %v44
  %v182 = vunpack.c.l.b16 %v45
  %v183 = vunpack.c.l.b16 %v46
  %v184 = vunpack.c.l.b16 %v47
  %v185 = vunpack.c.l.b16 %v48
  %v186 = vunpack.c.l.b16 %v49
  %v187 = vunpack.c.l.b16 %v50
  %v188 = vunpack.c.l.b16 %v51
  %v189 = vunpack.c.l.b16 %v52
  %v190 = vunpack.c.l.b16 %v53
  %v191 = vunpack.c.l.b16 %v54
  %v192 = vunpack.c.l.b16 %v55
  %v193 = vunpack.c.l.b16 %v56
  %v194 = vunpack.c.l.b16 %v57
  %v195 = vunpack.c.l.b16 %v58
  %v196 = vunpack.c.l.b16 %v59
  %v197 = vunpack.c.l.b16 %v60
  %v198 = vunpack.c.l.b16 %v61
  %v199 = vunpack.c.l.b16 %v62
  %v200 = vunpack.c.l.b16 %v63
  %v201 = vunpack.c.l.b16 %v64
  %v202 = vunpack.c.l.b16 %v65
  %v203 = vunpack.c.l.b16 %v66
  %v204 = vunpack.c.l.b16 %v67
  %v205 = vunpack.c.l.b16 %v68
  %v206 = vunpack.c.l.b16 %v69
  %v207 = vunpack.c.l.b16 %v70
  %v208 = vunpack.c.l.b16 %v71
  %v209 = vunpack.c.l.b16 %v72
  %v210 = vunpack.c.l.b16 %v73
  %v211 = vunpack.c.l.b16 %v74
  %v212 = vunpack.c.l.b16 %v75
  %v213 = vunpack.c.l.b16 %v76
  %v214 = vunpack.c.l.b16 %v77
  %v215 = vunpack.c.l.b16 %v78
  %v216 = vpack.c.b16 %v153, %v152
  %v217 = vpack.c.b16 %v155, %v154
  %v218 = vpack.c.b16 %v157, %v156
  %v219 = vpack.c.b16 %v159, %v158
  %v220 = vpack.c.b16 %v161, %v160
  %v221 = vpack.c.b16 %v163, %v162
  %v222 = vpack.c.b16 %v165, %v164
  %v223 = vpack.c.b16 %v167, %v166
  %v224 = vpack.c.b16 %v169, %v168
  %v225 = vpack.c.b16 %v171, %v170
  %v226 = vpack.c.b16 %v173, %v172
  %v227 = vpack.c.b16 %v175, %v174
  %v228 = vpack.c.b16 %v177, %v176
  %v229 = vpack.c.b16 %v179, %v178
  %v230 = vpack.c.b16 %v181, %v180
  %v231 = vpack.c.b16 %v183, %v182
  %v232 = vpack.c.b16 %v185, %v184
  %v233 = vpack.c.b16 %v187, %v186
  %v234 = vpack.c.b16 %v189, %v188
  %v235 = vpack.c.b16 %v191, %v190
  %v236 = vpack.c.b16 %v193, %v192
  %v237 = vpack.c.b16 %v195, %v194
  %v238 = vpack.c.b16 %v197, %v196
  %v239 = vpack.c.b16 %v199, %v198
  %v240 = vpack.c.b16 %v201, %v200
  %v241 = vpack.c.b16 %v203, %v202
  %v242 = vpack.c.b16 %v205, %v204
  %v243 = vpack.c.b16 %v207, %v206
  %v244 = vpack.c.b16 %v209, %v208
  %v245 = vpack.c.b16 %v211, %v210
  %v246 = vpack.c.b16 %v213, %v212
  %v247 = vpack.c.b16 %v215, %v214
  %v253 = vunpack.c.l.b16 %v79
  %v254 = vunpack.c.l.b16 %v80
  %v255 = vunpack.c.l.b16 %v81
  %v256 = vunpack.c.l.b16 %v82
  %v257 = vunpack.c.l.b16 %v83
  %v258 = vpack.c.b16 %v254, %v253
  %v259 = vpack.c.b16 %v256, %v255
  %v260 = vpack.c.b16 %v257, %v257
  %vm263 = vcmask 293888
  %v265 = vsel %vm263, %v216, 0
  %v268 = vsel %vm263, %v217, 0
  %v271 = vsel %vm263, %v218, 0
  %v274 = vsel %vm263, %v219, 0
  %v277 = vsel %vm263, %v220, 0
  %v280 = vsel %vm263, %v221, 0
  %v283 = vsel %vm263, %v222, 0
  %v286 = vsel %vm263, %v223, 0
  %v289 = vsel %vm263, %v224, 0
  %v292 = vsel %vm263, %v225, 0
  %v295 = vsel %vm263, %v226, 0
  %v298 = vsel %vm263, %v227, 0
  %v301 = vsel %vm263, %v228, 0
  %v304 = vsel %vm263, %v229, 0
  %v307 = vsel %vm263, %v230, 0
  %v310 = vsel %vm263, %v231, 0
  %v313 = vsel %vm263, %v232, 0
  %v316 = vsel %vm263, %v233, 0
  %v319 = vsel %vm263, %v234, 0
  %v322 = vsel %vm263, %v235, 0
  %v325 = vsel %vm263, %v236, 0
  %v328 = vsel %vm263, %v237, 0
  %v331 = vsel %vm263, %v238, 0
  %v334 = vsel %vm263, %v239, 0
  %v337 = vsel %vm263, %v240, 0
  %v340 = vsel %vm263, %v241, 0
  %v343 = vsel %vm263, %v242, 0
  %v346 = vsel %vm263, %v243, 0
  %v349 = vsel %vm263, %v244, 0
  %v352 = vsel %vm263, %v245, 0
  %v355 = vsel %vm263, %v246, 0
  %v358 = vsel %vm263, %v247, 0
  %vm360 = vcmask 1041408
  %v362 = vsel %vm360, %v260, 0
  %364 = vmatpush.bf16.msra.mxu0 0
  %365 = vmatpush.bf16.msra.mxu0 0
  %366 = vmatpush.bf16.msra.mxu0 0
  %367 = vmatpush.bf16.msra.mxu0 0
  %368 = vmatpush.bf16.msra.mxu0 0
  %369 = vmatpush.bf16.msra.mxu0 %v362
  %370 = vmatpush.bf16.msra.mxu0 %v259
  %371 = vmatpush.bf16.msra.mxu0 %v258
  %372 = vmatmul.bf16.gmra.mxu0 %v265
  %v373 = vpop.f32.mrf.mxu0
  %v374 = vadd.f32 %v86, %v373
  %v375 = vpop.f32.mrf.mxu0
  %v376 = vadd.f32 %v86, %v375
  %377 = vmatmul.bf16.gmra.mxu0 %v268
  %v378 = vpop.f32.mrf.mxu0
  %v379 = vadd.f32 %v86, %v378
  %v380 = vpop.f32.mrf.mxu0
  %v381 = vadd.f32 %v86, %v380
  %382 = vmatmul.bf16.gmra.mxu0 %v271
  %v383 = vpop.f32.mrf.mxu0
  %v384 = vadd.f32 %v86, %v383
  %v385 = vpop.f32.mrf.mxu0
  %v386 = vadd.f32 %v86, %v385
  %387 = vmatmul.bf16.gmra.mxu0 %v274
  %v388 = vpop.f32.mrf.mxu0
  %v389 = vadd.f32 %v86, %v388
  %v390 = vpop.f32.mrf.mxu0
  %v391 = vadd.f32 %v86, %v390
  %392 = vmatmul.bf16.gmra.mxu0 %v277
  %v393 = vpop.f32.mrf.mxu0
  %v394 = vadd.f32 %v86, %v393
  %v395 = vpop.f32.mrf.mxu0
  %v396 = vadd.f32 %v86, %v395
  %397 = vmatmul.bf16.gmra.mxu0 %v280
  %v398 = vpop.f32.mrf.mxu0
  %v399 = vadd.f32 %v86, %v398
  %v400 = vpop.f32.mrf.mxu0
  %v401 = vadd.f32 %v86, %v400
  %402 = vmatmul.bf16.gmra.mxu0 %v283
  %v403 = vpop.f32.mrf.mxu0
  %v404 = vadd.f32 %v86, %v403
  %v405 = vpop.f32.mrf.mxu0
  %v406 = vadd.f32 %v86, %v405
  %407 = vmatmul.bf16.gmra.mxu0 %v286
  %v408 = vpop.f32.mrf.mxu0
  %v409 = vadd.f32 %v86, %v408
  %v410 = vpop.f32.mrf.mxu0
  %v411 = vadd.f32 %v86, %v410
  %412 = vmatmul.bf16.gmra.mxu0 %v289
  %v413 = vpop.f32.mrf.mxu0
  %v414 = vadd.f32 %v86, %v413
  %v415 = vpop.f32.mrf.mxu0
  %v416 = vadd.f32 %v86, %v415
  %417 = vmatmul.bf16.gmra.mxu0 %v292
  %v418 = vpop.f32.mrf.mxu0
  %v419 = vadd.f32 %v86, %v418
  %v420 = vpop.f32.mrf.mxu0
  %v421 = vadd.f32 %v86, %v420
  %422 = vmatmul.bf16.gmra.mxu0 %v295
  %v423 = vpop.f32.mrf.mxu0
  %v424 = vadd.f32 %v86, %v423
  %v425 = vpop.f32.mrf.mxu0
  %v426 = vadd.f32 %v86, %v425
  %427 = vmatmul.bf16.gmra.mxu0 %v298
  %v428 = vpop.f32.mrf.mxu0
  %v429 = vadd.f32 %v86, %v428
  %v430 = vpop.f32.mrf.mxu0
  %v431 = vadd.f32 %v86, %v430
  %432 = vmatmul.bf16.gmra.mxu0 %v301
  %v433 = vpop.f32.mrf.mxu0
  %v434 = vadd.f32 %v86, %v433
  %v435 = vpop.f32.mrf.mxu0
  %v436 = vadd.f32 %v86, %v435
  %437 = vmatmul.bf16.gmra.mxu0 %v304
  %v438 = vpop.f32.mrf.mxu0
  %v439 = vadd.f32 %v86, %v438
  %v440 = vpop.f32.mrf.mxu0
  %v441 = vadd.f32 %v86, %v440
  %442 = vmatmul.bf16.gmra.mxu0 %v307
  %v443 = vpop.f32.mrf.mxu0
  %v444 = vadd.f32 %v86, %v443
  %v445 = vpop.f32.mrf.mxu0
  %v446 = vadd.f32 %v86, %v445
  %447 = vmatmul.bf16.gmra.mxu0 %v310
  %v448 = vpop.f32.mrf.mxu0
  %v449 = vadd.f32 %v86, %v448
  %v450 = vpop.f32.mrf.mxu0
  %v451 = vadd.f32 %v86, %v450
  %452 = vmatmul.bf16.gmra.mxu0 %v313
  %v453 = vpop.f32.mrf.mxu0
  %v454 = vadd.f32 %v86, %v453
  %v455 = vpop.f32.mrf.mxu0
  %v456 = vadd.f32 %v86, %v455
  %457 = vmatmul.bf16.gmra.mxu0 %v316
  %v458 = vpop.f32.mrf.mxu0
  %v459 = vadd.f32 %v86, %v458
  %v460 = vpop.f32.mrf.mxu0
  %v461 = vadd.f32 %v86, %v460
  %462 = vmatmul.bf16.gmra.mxu0 %v319
  %v463 = vpop.f32.mrf.mxu0
  %v464 = vadd.f32 %v86, %v463
  %v465 = vpop.f32.mrf.mxu0
  %v466 = vadd.f32 %v86, %v465
  %467 = vmatmul.bf16.gmra.mxu0 %v322
  %v468 = vpop.f32.mrf.mxu0
  %v469 = vadd.f32 %v86, %v468
  %v470 = vpop.f32.mrf.mxu0
  %v471 = vadd.f32 %v86, %v470
  %472 = vmatmul.bf16.gmra.mxu0 %v325
  %v473 = vpop.f32.mrf.mxu0
  %v474 = vadd.f32 %v86, %v473
  %v475 = vpop.f32.mrf.mxu0
  %v476 = vadd.f32 %v86, %v475
  %477 = vmatmul.bf16.gmra.mxu0 %v328
  %v478 = vpop.f32.mrf.mxu0
  %v479 = vadd.f32 %v86, %v478
  %v480 = vpop.f32.mrf.mxu0
  %v481 = vadd.f32 %v86, %v480
  %482 = vmatmul.bf16.gmra.mxu0 %v331
  %v483 = vpop.f32.mrf.mxu0
  %v484 = vadd.f32 %v86, %v483
  %v485 = vpop.f32.mrf.mxu0
  %v486 = vadd.f32 %v86, %v485
  %487 = vmatmul.bf16.gmra.mxu0 %v334
  %v488 = vpop.f32.mrf.mxu0
  %v489 = vadd.f32 %v86, %v488
  %v490 = vpop.f32.mrf.mxu0
  %v491 = vadd.f32 %v86, %v490
  %492 = vmatmul.bf16.gmra.mxu0 %v337
  %v493 = vpop.f32.mrf.mxu0
  %v494 = vadd.f32 %v86, %v493
  %v495 = vpop.f32.mrf.mxu0
  %v496 = vadd.f32 %v86, %v495
  %497 = vmatmul.bf16.gmra.mxu0 %v340
  %v498 = vpop.f32.mrf.mxu0
  %v499 = vadd.f32 %v86, %v498
  %v500 = vpop.f32.mrf.mxu0
  %v501 = vadd.f32 %v86, %v500
  %502 = vmatmul.bf16.gmra.mxu0 %v343
  %v503 = vpop.f32.mrf.mxu0
  %v504 = vadd.f32 %v86, %v503
  %v505 = vpop.f32.mrf.mxu0
  %v506 = vadd.f32 %v86, %v505
  %507 = vmatmul.bf16.gmra.mxu0 %v346
  %v508 = vpop.f32.mrf.mxu0
  %v509 = vadd.f32 %v86, %v508
  %v510 = vpop.f32.mrf.mxu0
  %v511 = vadd.f32 %v86, %v510
  %512 = vmatmul.bf16.gmra.mxu0 %v349
  %v513 = vpop.f32.mrf.mxu0
  %v514 = vadd.f32 %v86, %v513
  %v515 = vpop.f32.mrf.mxu0
  %v516 = vadd.f32 %v86, %v515
  %517 = vmatmul.bf16.gmra.mxu0 %v352
  %v518 = vpop.f32.mrf.mxu0
  %v519 = vadd.f32 %v86, %v518
  %v520 = vpop.f32.mrf.mxu0
  %v521 = vadd.f32 %v86, %v520
  %522 = vmatmul.bf16.gmra.mxu0 %v355
  %v523 = vpop.f32.mrf.mxu0
  %v524 = vadd.f32 %v86, %v523
  %v525 = vpop.f32.mrf.mxu0
  %v526 = vadd.f32 %v86, %v525
  %527 = vmatmul.bf16.gmra.mxu0 %v358
  %v528 = vpop.f32.mrf.mxu0
  %v529 = vadd.f32 %v86, %v528
  %v530 = vpop.f32.mrf.mxu0
  %v531 = vadd.f32 %v86, %v530
  %532 = vdwg.mxu0
  %vm533 = vcmask 64512
  %534 = vst.msk [vmem:[%s3] sm:$0xff] %vm533, %v374
  %535 = vst.msk [vmem:[%s3 + $0x8] sm:$0xff] %vm533, %v376
  %536 = vst.msk [vmem:[%s3 + $0x10] sm:$0xff] %vm533, %v379
  %537 = vst.msk [vmem:[%s3 + $0x18] sm:$0xff] %vm533, %v381
  %538 = vst.msk [vmem:[%s3 + $0x20] sm:$0xff] %vm533, %v384
  %539 = vst.msk [vmem:[%s3 + $0x28] sm:$0xff] %vm533, %v386
  %540 = vst.msk [vmem:[%s3 + $0x30] sm:$0xff] %vm533, %v389
  %541 = vst.msk [vmem:[%s3 + $0x38] sm:$0xff] %vm533, %v391
  %542 = vst.msk [vmem:[%s3 + $0x40] sm:$0xff] %vm533, %v394
  %543 = vst.msk [vmem:[%s3 + $0x48] sm:$0xff] %vm533, %v396
  %544 = vst.msk [vmem:[%s3 + $0x50] sm:$0xff] %vm533, %v399
  %545 = vst.msk [vmem:[%s3 + $0x58] sm:$0xff] %vm533, %v401
  %546 = vst.msk [vmem:[%s3 + $0x60] sm:$0xff] %vm533, %v404
  %547 = vst.msk [vmem:[%s3 + $0x68] sm:$0xff] %vm533, %v406
  %548 = vst.msk [vmem:[%s3 + $0x70] sm:$0xff] %vm533, %v409
  %549 = vst.msk [vmem:[%s3 + $0x78] sm:$0xff] %vm533, %v411
  %550 = vst.msk [vmem:[%s3 + $0x80] sm:$0xff] %vm533, %v414
  %551 = vst.msk [vmem:[%s3 + $0x88] sm:$0xff] %vm533, %v416
  %552 = vst.msk [vmem:[%s3 + $0x90] sm:$0xff] %vm533, %v419
  %553 = vst.msk [vmem:[%s3 + $0x98] sm:$0xff] %vm533, %v421
  %554 = vst.msk [vmem:[%s3 + $0xa0] sm:$0xff] %vm533, %v424
  %555 = vst.msk [vmem:[%s3 + $0xa8] sm:$0xff] %vm533, %v426
  %556 = vst.msk [vmem:[%s3 + $0xb0] sm:$0xff] %vm533, %v429
  %557 = vst.msk [vmem:[%s3 + $0xb8] sm:$0xff] %vm533, %v431
  %558 = vst.msk [vmem:[%s3 + $0xc0] sm:$0xff] %vm533, %v434
  %559 = vst.msk [vmem:[%s3 + $0xc8] sm:$0xff] %vm533, %v436
  %560 = vst.msk [vmem:[%s3 + $0xd0] sm:$0xff] %vm533, %v439
  %561 = vst.msk [vmem:[%s3 + $0xd8] sm:$0xff] %vm533, %v441
  %562 = vst.msk [vmem:[%s3 + $0xe0] sm:$0xff] %vm533, %v444
  %563 = vst.msk [vmem:[%s3 + $0xe8] sm:$0xff] %vm533, %v446
  %564 = vst.msk [vmem:[%s3 + $0xf0] sm:$0xff] %vm533, %v449
  %565 = vst.msk [vmem:[%s3 + $0xf8] sm:$0xff] %vm533, %v451
  %566 = vst.msk [vmem:[%s3 + $0x100] sm:$0xff] %vm533, %v454
  %567 = vst.msk [vmem:[%s3 + $0x108] sm:$0xff] %vm533, %v456
  %568 = vst.msk [vmem:[%s3 + $0x110] sm:$0xff] %vm533, %v459
  %569 = vst.msk [vmem:[%s3 + $0x118] sm:$0xff] %vm533, %v461
  %570 = vst.msk [vmem:[%s3 + $0x120] sm:$0xff] %vm533, %v464
  %571 = vst.msk [vmem:[%s3 + $0x128] sm:$0xff] %vm533, %v466
  %572 = vst.msk [vmem:[%s3 + $0x130] sm:$0xff] %vm533, %v469
  %573 = vst.msk [vmem:[%s3 + $0x138] sm:$0xff] %vm533, %v471
  %574 = vst.msk [vmem:[%s3 + $0x140] sm:$0xff] %vm533, %v474
  %575 = vst.msk [vmem:[%s3 + $0x148] sm:$0xff] %vm533, %v476
  %576 = vst.msk [vmem:[%s3 + $0x150] sm:$0xff] %vm533, %v479
  %577 = vst.msk [vmem:[%s3 + $0x158] sm:$0xff] %vm533, %v481
  %578 = vst.msk [vmem:[%s3 + $0x160] sm:$0xff] %vm533, %v484
  %579 = vst.msk [vmem:[%s3 + $0x168] sm:$0xff] %vm533, %v486
  %580 = vst.msk [vmem:[%s3 + $0x170] sm:$0xff] %vm533, %v489
  %581 = vst.msk [vmem:[%s3 + $0x178] sm:$0xff] %vm533, %v491
  %582 = vst.msk [vmem:[%s3 + $0x180] sm:$0xff] %vm533, %v494
  %583 = vst.msk [vmem:[%s3 + $0x188] sm:$0xff] %vm533, %v496
  %584 = vst.msk [vmem:[%s3 + $0x190] sm:$0xff] %vm533, %v499
  %585 = vst.msk [vmem:[%s3 + $0x198] sm:$0xff] %vm533, %v501
  %586 = vst.msk [vmem:[%s3 + $0x1a0] sm:$0xff] %vm533, %v504
  %587 = vst.msk [vmem:[%s3 + $0x1a8] sm:$0xff] %vm533, %v506
  %588 = vst.msk [vmem:[%s3 + $0x1b0] sm:$0xff] %vm533, %v509
  %589 = vst.msk [vmem:[%s3 + $0x1b8] sm:$0xff] %vm533, %v511
  %590 = vst.msk [vmem:[%s3 + $0x1c0] sm:$0xff] %vm533, %v514
  %591 = vst.msk [vmem:[%s3 + $0x1c8] sm:$0xff] %vm533, %v516
  %592 = vst.msk [vmem:[%s3 + $0x1d0] sm:$0xff] %vm533, %v519
  %593 = vst.msk [vmem:[%s3 + $0x1d8] sm:$0xff] %vm533, %v521
  %594 = vst.msk [vmem:[%s3 + $0x1e0] sm:$0xff] %vm533, %v524
  %595 = vst.msk [vmem:[%s3 + $0x1e8] sm:$0xff] %vm533, %v526
  %596 = vst.msk [vmem:[%s3 + $0x1f0] sm:$0xff] %vm533, %v529
  %597 = vst.msk [vmem:[%s3 + $0x1f8] sm:$0xff] %vm533, %v531
  // Predicated region
  $region14: #{tpu_custom_call.1} parent=0 // pred_check
    _
  $region15: #{tpu_custom_call.1} parent=0 // pred_check_branch
    %599 = sbr.rel (0) target = $region17
  $region16: #{tpu_custom_call.1} parent=0 // pred_region
    _
  $region17: #{tpu_custom_call.1} parent=0 // pred_fallthru
    _
  // Predicated region
  $region18: #{tpu_custom_call.1} parent=0 // pred_check
    _
  $region19: #{tpu_custom_call.1} parent=0 // pred_check_branch
    %601 = sbr.rel (0) target = $region21
  $region20: #{tpu_custom_call.1} parent=0 // pred_region
    _
  $region21: #{tpu_custom_call.1} parent=0 // pred_fallthru
    _

</llo_original>
